<compile_context>
chip_gen: v7x
topology: tpu7x:2x2x1
jax: 0.10.0
libtpu: 0.0.40
codegen_flags: <defaults>
</compile_context>

<pallas_src>
import math

import jax
import jax.numpy as jnp
from jax.experimental import pallas as pl
from jax.experimental.pallas import tpu as pltpu


def _round_up(x, m):
    return ((x + m - 1) // m) * m


# ----------------------------------------------------------------------------
# Pallas kernels:  out[i, j] (+)= x[i, kk] @ w[kk, j]
# x is loaded in its HBM dtype (f32) and cast to the weight dtype (bf16) on the
# VPU inside the kernel; the MXU accumulates in f32.
# ----------------------------------------------------------------------------
def _mm_single_kernel(x_ref, w_ref, o_ref):
    o_ref[...] = jnp.dot(
        x_ref[...].astype(w_ref.dtype), w_ref[...],
        preferred_element_type=jnp.float32).astype(o_ref.dtype)


def _mm_acc_kernel(x_ref, w_ref, o_ref):
    # o_ref is f32 and its block index (i, j) is constant along the kk axis, so
    # it stays resident in VMEM and doubles as the accumulator (no scratch).
    kk = pl.program_id(2)
    part = jnp.dot(x_ref[...].astype(w_ref.dtype), w_ref[...],
                   preferred_element_type=jnp.float32)

    @pl.when(kk == 0)
    def _first():
        o_ref[...] = part

    @pl.when(kk > 0)
    def _accum():
        o_ref[...] += part


# ----------------------------------------------------------------------------
# Tile planner
# ----------------------------------------------------------------------------
def _plan_tiles(m, k, n_pad, x_isz, w_isz, o_isz, budget_bytes):
    """Pick (tm, tk, tn).  Second-to-last block dims are multiples of 8 (or the
    full dim); last dims multiples of 128 (or the full dim).  No minimum step
    count: the grid is a serial loop per TensorCore, so bigger tiles are
    strictly better until VMEM runs out."""

    def footprint(tm, tk, tn):
        # Pallas double-buffers each operand/output block; no extra scratch.
        return 2 * (tm * tk * x_isz + tk * tn * w_isz + tm * tn * o_isz)

    # Adaptive row-tile cap: narrow outputs can afford much larger row tiles.
    cap = 2048 if n_pad <= 512 else (1024 if n_pad <= 2048 else 512)
    tm = m if m <= cap else cap
    tn = n_pad
    tk = k

    def shrink_tm(t):
        return max(128, ((t // 2) // 8) * 8) if t > 128 else t

    def shrink_tn(t):
        return max(256, ((t // 2) // 128) * 128) if t > 256 else t

    def shrink_tk(t):
        # Only K-tile with clean 128-multiple blocks that evenly divide K, and
        # keep tk >= 512 so accumulator churn never binds the vector-store slot.
        half = t // 2
        if t % 2 == 0 and half >= 512 and half % 128 == 0 and k % half == 0:
            return half
        return t

    while footprint(tm, tk, tn) > budget_bytes:
        x_blk = tm * tk * x_isz
        w_blk = tk * tn * w_isz
        ntm, ntn, ntk = shrink_tm(tm), shrink_tn(tn), shrink_tk(tk)
        if ntm != tm and x_blk >= w_blk:
            tm = ntm
        elif ntn != tn:
            tn = ntn
        elif ntk != tk:
            tk = ntk
        elif ntm != tm:
            tm = ntm
        else:
            # TODO(synk): cannot fit the budget (e.g. huge K that is not a
            # multiple of 256); rely on explicit vmem_limit_bytes headroom.
            break
    return tm, tk, tn


# ----------------------------------------------------------------------------
# Fused (complex) matmul via pallas_call
# ----------------------------------------------------------------------------
def _fused_complex_matmul(x2d, w2d, *, out_dtype, vmem_budget_bytes):
    m, k = x2d.shape
    k2, n_pad = w2d.shape
    assert k == k2 and n_pad % 128 == 0  # lane-dense output

    x_isz = x2d.dtype.itemsize
    w_isz = w2d.dtype.itemsize
    o_isz = jnp.dtype(out_dtype).itemsize
    tm, tk, tn = _plan_tiles(m, k, n_pad, x_isz, w_isz, o_isz, vmem_budget_bytes)

    k_steps = 1 if tk == k else k // tk
    if k_steps > 1:
        # Direct accumulation into the resident output block requires f32.
        out_dtype = jnp.float32
        o_isz = 4

    grid = (pl.cdiv(m, tm), pl.cdiv(n_pad, tn), k_steps)
    kernel = _mm_acc_kernel if k_steps > 1 else _mm_single_kernel

    footprint = 2 * (tm * tk * x_isz + tk * tn * w_isz + tm * tn * o_isz)
    vmem_limit = int(min(48 << 20, max(24 << 20, footprint + (8 << 20))))

    flops = 2 * m * k * n_pad
    bytes_accessed = (pl.cdiv(n_pad, tn) * m * k * x_isz
                      + pl.cdiv(m, tm) * k * n_pad * w_isz
                      + m * n_pad * o_isz)

    # Note: for deep K-tiling with very short per-step compute, the weight spec
    # could use pipeline_mode=pl.Buffered(3) (verify VMEM headroom first).
    return pl.pallas_call(
        kernel,
        out_shape=jax.ShapeDtypeStruct((m, n_pad), out_dtype),
        grid=grid,
        in_specs=[
            pl.BlockSpec((tm, tk), lambda i, j, kk: (i, kk)),
            pl.BlockSpec((tk, tn), lambda i, j, kk: (kk, j)),
        ],
        out_specs=pl.BlockSpec((tm, tn), lambda i, j, kk: (i, j)),
        compiler_params=pltpu.CompilerParams(
            dimension_semantics=("parallel", "parallel", "arbitrary"),
            vmem_limit_bytes=vmem_limit),
        cost_estimate=pl.CostEstimate(
            flops=flops, transcendentals=0, bytes_accessed=bytes_accessed),
    )(x2d, w2d)


# ----------------------------------------------------------------------------
# Weight preparation (do this once and cache when weights are static)
# ----------------------------------------------------------------------------
def prepare_ofdm_weight(w_real, w_imag, *, symbol_length, cp_length,
                        weight_dtype=jnp.bfloat16):
    """Interleaved complex weight with CP removal folded in.

    Rows alternate (a_n, b_n) contributions and columns alternate (r_k, i_k),
    so the whole OFDMDemodulator forward becomes
        x.reshape(M, 2*symbol_length) @ W
    with  r = a @ Wr - b @ Wi  and  i = a @ Wi + b @ Wr.
    Rows covering the cyclic prefix / trailing samples are zero, and the column
    count is padded to a multiple of 128 for lane-dense stores."""
    fft_in, fft_out = w_real.shape
    assert w_imag.shape == (fft_in, fft_out)
    assert symbol_length >= cp_length + fft_in
    wr = w_real.astype(jnp.float32)
    wi = w_imag.astype(jnp.float32)
    row_a = jnp.stack([wr, wi], axis=-1)      # a_n -> (+Wr, +Wi)
    row_b = jnp.stack([-wi, wr], axis=-1)     # b_n -> (-Wi, +Wr)
    w = jnp.stack([row_a, row_b], axis=1).reshape(2 * fft_in, 2 * fft_out)
    n = 2 * fft_out
    n_pad = _round_up(n, 128)
    pad_lo = 2 * cp_length
    pad_hi = 2 * (symbol_length - cp_length - fft_in)
    if pad_lo or pad_hi or n_pad != n:
        w = jnp.pad(w, ((pad_lo, pad_hi), (0, n_pad - n)))
    return w.astype(weight_dtype)


def dft_weights(fft_size, dtype=jnp.float32):
    """DFT matrices so the same kernel reproduces torch.fft.fft (learnable=False)."""
    n = jnp.arange(fft_size, dtype=jnp.float32)[:, None]
    k = jnp.arange(fft_size, dtype=jnp.float32)[None, :]
    ang = -2.0 * jnp.pi * n * k / fft_size
    return jnp.cos(ang).astype(dtype), jnp.sin(ang).astype(dtype)


# ----------------------------------------------------------------------------
# OFDMDemodulator.forward
# ----------------------------------------------------------------------------
def ofdm_demodulate(x, w_real=None, w_imag=None, *, fft_size, cp_length=0,
                    prepared_weight=None, out_dtype=jnp.float32,
                    weight_dtype=jnp.bfloat16, vmem_budget_bytes=20 << 20):
    """x: [B, num_symbols, symbol_length, 2] -> [B, num_symbols, fft_size, 2]."""
    b, num_symbols, symbol_length, two = x.shape
    assert two == 2 and symbol_length >= cp_length + fft_size
    m = b * num_symbols
    k = 2 * symbol_length
    n = 2 * fft_size
    n_pad = _round_up(n, 128)

    if prepared_weight is None:
        prepared_weight = prepare_ofdm_weight(
            w_real, w_imag, symbol_length=symbol_length, cp_length=cp_length,
            weight_dtype=weight_dtype)
    assert prepared_weight.shape == (k, n_pad)

    # Zero-copy view: (real, imag) interleaved along the last axis; the cyclic
    # prefix is removed by zero weight rows, never by slicing the activation.
    x2d = x.reshape(m, k)

    out = _fused_complex_matmul(x2d, prepared_weight,
                                out_dtype=out_dtype,
                                vmem_budget_bytes=vmem_budget_bytes)
    if n_pad != n:
        # TODO(synk): fuse this de-pad into the consumer when 2*fft_size is not
        # a multiple of 128 (it costs an extra read+write of the output).
        out = out[:, :n]
    return out.reshape(b, num_symbols, fft_size, 2)


# ----------------------------------------------------------------------------
# Pure-JAX reference (mirrors the PyTorch module, f32)
# ----------------------------------------------------------------------------
def ofdm_demod_reference(x, w_real, w_imag, *, fft_size, cp_length=0):
    b, s, _, _ = x.shape
    xc = x[:, :, cp_length:cp_length + fft_size, :].astype(jnp.float32)
    a = xc[..., 0].reshape(b * s, fft_size)
    bb = xc[..., 1].reshape(b * s, fft_size)
    r = a @ w_real - bb @ w_imag
    i = a @ w_imag + bb @ w_real
    return jnp.stack([r, i], axis=-1).reshape(b, s, fft_size, 2)


# ----------------------------------------------------------------------------
if __name__ == "__main__":
    key = jax.random.PRNGKey(0)
    kx, kr, ki, kx2, kr2, ki2 = jax.random.split(key, 6)

    # ---- learnable=True path (module default), small shapes ----
    B, NUM_SYMBOLS, FFT_SIZE, CP = 2, 32, 64, 8
    SYMBOL_LEN = FFT_SIZE + CP
    x = jax.random.normal(kx, (B, NUM_SYMBOLS, SYMBOL_LEN, 2), jnp.float32)
    w_real = jax.random.normal(kr, (FFT_SIZE, FFT_SIZE), jnp.float32) / math.sqrt(FFT_SIZE)
    w_imag = jax.random.normal(ki, (FFT_SIZE, FFT_SIZE), jnp.float32) / math.sqrt(FFT_SIZE)

    out = jax.block_until_ready(
        ofdm_demodulate(x, w_real, w_imag, fft_size=FFT_SIZE, cp_length=CP))
    assert out.shape == (B, NUM_SYMBOLS, FFT_SIZE, 2), out.shape
    ref = ofdm_demod_reference(x, w_real, w_imag, fft_size=FFT_SIZE, cp_length=CP)
    assert jnp.allclose(out, ref, atol=5e-2, rtol=5e-2), \
        float(jnp.max(jnp.abs(out - ref)))

    # ---- learnable=False path: same kernel with cached DFT weights == torch.fft.fft ----
    dr, di = dft_weights(FFT_SIZE)
    w_prep = prepare_ofdm_weight(dr, di, symbol_length=SYMBOL_LEN, cp_length=CP)
    out_fft = jax.block_until_ready(
        ofdm_demodulate(x, fft_size=FFT_SIZE, cp_length=CP, prepared_weight=w_prep))
    xc = x[:, :, CP:CP + FFT_SIZE, 0] + 1j * x[:, :, CP:CP + FFT_SIZE, 1]
    f = jnp.fft.fft(xc, axis=-1)
    ref_fft = jnp.stack([f.real, f.imag], axis=-1)
    assert jnp.allclose(out_fft, ref_fft, atol=5e-1, rtol=5e-2), \
        float(jnp.max(jnp.abs(out_fft - ref_fft)))

    # ---- forced K-tiled + N-tiled path (tiny VMEM budget), non-128 output width ----
    B2, S2, FFT2, CP2 = 2, 8, 480, 32
    x2 = jax.random.normal(kx2, (B2, S2, FFT2 + CP2, 2), jnp.float32)
    wr2 = jax.random.normal(kr2, (FFT2, FFT2), jnp.float32) / math.sqrt(FFT2)
    wi2 = jax.random.normal(ki2, (FFT2, FFT2), jnp.float32) / math.sqrt(FFT2)
    out2 = jax.block_until_ready(
        ofdm_demodulate(x2, wr2, wi2, fft_size=FFT2, cp_length=CP2,
                        vmem_budget_bytes=1 << 20))
    assert out2.shape == (B2, S2, FFT2, 2), out2.shape
    ref2 = ofdm_demod_reference(x2, wr2, wi2, fft_size=FFT2, cp_length=CP2)
    assert jnp.allclose(out2, ref2, atol=8e-2, rtol=5e-2), \
        float(jnp.max(jnp.abs(out2 - ref2)))

    print("KERNEL_OK")
</pallas_src>

<mosaic_0001>
module attributes {stable_mosaic.version = 11 : i64} {
  func.func @_mm_single_kernel(%arg0: i32, %arg1: i32, %arg2: i32, %arg3: memref<64x144xf32, #tpu.memory_space<vmem>>, %arg4: memref<144x128xbf16, #tpu.memory_space<vmem>>, %arg5: memref<64x128xf32, #tpu.memory_space<vmem>>) attributes {dimension_semantics = [#tpu.dimension_semantics<parallel>, #tpu.dimension_semantics<parallel>, #tpu.dimension_semantics<arbitrary>], iteration_bounds = array<i64: 1, 1, 1>, scalar_prefetch = 0 : i64, scratch_operands = 0 : i64, tpu.core_type = #tpu.core_type<tc>, window_params = [{transform_indices = @transform_0, window_bounds = array<i64: 64, 144>}, {transform_indices = @transform_1, window_bounds = array<i64: 144, 128>}, {transform_indices = @transform_2, window_bounds = array<i64: 64, 128>}]} {
    %c0 = arith.constant 0 : index
    %c0_0 = arith.constant 0 : index
    %0 = vector.load %arg3[%c0, %c0_0] : memref<64x144xf32, #tpu.memory_space<vmem>>, vector<64x144xf32>
    %1 = arith.truncf %0 : vector<64x144xf32> to vector<64x144xbf16>
    %c0_1 = arith.constant 0 : index
    %c0_2 = arith.constant 0 : index
    %2 = vector.load %arg4[%c0_1, %c0_2] : memref<144x128xbf16, #tpu.memory_space<vmem>>, vector<144x128xbf16>
    %cst = arith.constant dense<0.000000e+00> : vector<64x128xf32>
    %3 = tpu.matmul %1, %2, %cst {dimension_numbers = #tpu.dot_dimension_numbers<[1], [0], [0], [1], [0, 0, 1, 1], [], []>} : vector<64x144xbf16>, vector<144x128xbf16>, vector<64x128xf32> -> vector<64x128xf32>
    %c0_3 = arith.constant 0 : index
    %c0_4 = arith.constant 0 : index
    %4 = vector.load %arg5[%c0_3, %c0_4] : memref<64x128xf32, #tpu.memory_space<vmem>>, vector<64x128xf32>
    tpu.vector_store %arg5[%c0_3, %c0_4], %3 {strides = array<i32>} : memref<64x128xf32, #tpu.memory_space<vmem>>, vector<64x128xf32>,
    return
  }
  func.func @transform_0(%arg0: i32, %arg1: i32, %arg2: i32) -> (i32, i32) {
    %c0_i32 = arith.constant 0 : i32
    return %arg0, %arg2 : i32, i32
  }
  func.func @transform_1(%arg0: i32, %arg1: i32, %arg2: i32) -> (i32, i32) {
    %c0_i32 = arith.constant 0 : i32
    return %arg2, %arg1 : i32, i32
  }
  func.func @transform_2(%arg0: i32, %arg1: i32, %arg2: i32) -> (i32, i32) {
    %c0_i32 = arith.constant 0 : i32
    return %arg0, %arg1 : i32, i32
  }
}

</mosaic_0001>

<llo_original>
// kernel: tpu_custom_call.1
$region0: #{tpu_custom_call.1}
  #allocation0 [shape = 'u32[]', space=smem, size = 0x4, offset = 0x4, fixed_abs, tag = 'smem constant byte address 0x4 - core index']
  #allocation1 [shape = 'u32[144,128]{1,0:T(1,128)}', space=vmem, size = 0x12000, scoped, tag = 'internal scratch']
  %s0 = inlined_call_operand.hbm [shape: f32[64,144], index: 0, kind: input, shape index: {}]
  %s1 = inlined_call_operand.hbm [shape: bf16[144,128], index: 1, kind: input, shape index: {}]
  %s2 = inlined_call_operand.hbm [shape: f32[64,128], index: 2, kind: output, shape index: {}]
  %s3 = sld [smem:[#allocation0]]
  $region26: #{tpu_custom_call.1} parent=0
    _
  %s5 = ssub.s32 1, %s3
  %s6 = scalar_select 0, %s5, %s3
  $region1: #{tpu_custom_call.1} parent=0
    #allocation2 [shape = 'u8[65536]{0}', space=vmem, size = 0x10000, scoped, tag = 'input window, operand 0, single buffered']
    #allocation3 [shape = 's32[1]{0}', space=sflag, size = 0x4, scoped, tag = 'scoped memory for tpu_custom_call.1']
    #allocation4 [shape = 's32[1]{0}', space=sflag, size = 0x4, scoped, tag = 'scoped memory for tpu_custom_call.1']
    #allocation5 [shape = 'u8[36864]{0}', space=vmem, size = 0x9000, scoped, tag = 'input window, operand 1, single buffered']
    #allocation6 [shape = 's32[1]{0}', space=sflag, size = 0x4, scoped, tag = 'scoped memory for tpu_custom_call.1']
    #allocation7 [shape = 'u8[32768]{0}', space=vmem, size = 0x8000, scoped, tag = 'output window, operand 0, single buffered']
    %7 = vsyncpa [#allocation3], 0
    %8 = vsyncpa [#allocation6], 0
    %9 = vsyncpa [#allocation4], 0
    // Predicated region
    $region2: #{tpu_custom_call.1} parent=1 // pred_check
      _
    $region3: #{tpu_custom_call.1} parent=1 // pred_check_branch
      %11 = sbr.rel (0) target = $region5
    $region4: #{tpu_custom_call.1} parent=1 // pred_region
      %s13 = ssub.s32 2048, 2048
      %14 = vsyncadd [#allocation3], %s13
      %s15 = sshll.u32 [#allocation2], 4
      %s16 = int_to_ptr.vmem [resolvable:$true] %s15
      %21 = dma.hbm_to_vmem [thread:$0]  %s0, 2048, %s16, [#allocation3], 256, 256, 16
    $region5: #{tpu_custom_call.1} parent=1 // pred_fallthru
      _
    // Predicated region
    $region6: #{tpu_custom_call.1} parent=1 // pred_check
      _
    $region7: #{tpu_custom_call.1} parent=1 // pred_check_branch
      %23 = sbr.rel (0) target = $region9
    $region8: #{tpu_custom_call.1} parent=1 // pred_region
      %s25 = ssub.s32 1152, 1152
      %26 = vsyncadd [#allocation6], %s25
      %s27 = sshll.u32 [#allocation5], 4
      %s28 = int_to_ptr.vmem [resolvable:$true] %s27
      %33 = dma.hbm_to_vmem [thread:$0]  %s1, 1152, %s28, [#allocation6], 64, 64, 4
    $region9: #{tpu_custom_call.1} parent=1 // pred_fallthru
      _
    // Predicated region
    $region10: #{tpu_custom_call.1} parent=1 // pred_check
      _
    $region11: #{tpu_custom_call.1} parent=1 // pred_check_branch
      %35 = sbr.rel (0) target = $region13
    $region12: #{tpu_custom_call.1} parent=1 // pred_region
      %36 = dma.done [#allocation3], 2048
    $region13: #{tpu_custom_call.1} parent=1 // pred_fallthru
      _
    // Predicated region
    $region14: #{tpu_custom_call.1} parent=1 // pred_check
      _
    $region15: #{tpu_custom_call.1} parent=1 // pred_check_branch
      %38 = sbr.rel (0) target = $region17
    $region16: #{tpu_custom_call.1} parent=1 // pred_region
      %39 = dma.done [#allocation6], 1152
    $region17: #{tpu_custom_call.1} parent=1 // pred_fallthru
      _
    %v41 = vld [vmem:[#allocation2] sm:$0xff]
    %v42 = vld [vmem:[#allocation2 + $0x8] sm:$0xff]
    %v43 = vld [vmem:[#allocation2 + $0x10] sm:$0xff]
    %v44 = vld [vmem:[#allocation2 + $0x18] sm:$0xff]
    %v45 = vld [vmem:[#allocation2 + $0x20] sm:$0xff]
    %v46 = vld [vmem:[#allocation2 + $0x28] sm:$0xff]
    %v47 = vld [vmem:[#allocation2 + $0x30] sm:$0xff]
    %v48 = vld [vmem:[#allocation2 + $0x38] sm:$0xff]
    %v49 = vld [vmem:[#allocation2 + $0x40] sm:$0xff]
    %v50 = vld [vmem:[#allocation2 + $0x48] sm:$0xff]
    %v51 = vld [vmem:[#allocation2 + $0x50] sm:$0xff]
    %v52 = vld [vmem:[#allocation2 + $0x58] sm:$0xff]
    %v53 = vld [vmem:[#allocation2 + $0x60] sm:$0xff]
    %v54 = vld [vmem:[#allocation2 + $0x68] sm:$0xff]
    %v55 = vld [vmem:[#allocation2 + $0x70] sm:$0xff]
    %v56 = vld [vmem:[#allocation2 + $0x78] sm:$0xff]
    %v57 = vpack.c.bf16 %v43, %v41
    %v58 = vpack.c.bf16 %v44, %v42
    %v59 = vpack.c.bf16 %v47, %v45
    %v60 = vpack.c.bf16 %v48, %v46
    %v61 = vpack.c.bf16 %v51, %v49
    %v62 = vpack.c.bf16 %v52, %v50
    %v63 = vpack.c.bf16 %v55, %v53
    %v64 = vpack.c.bf16 %v56, %v54
    %v65 = vld [vmem:[#allocation5] sm:$0xf]
    %v66 = vld [vmem:[#allocation5 + $0x4] sm:$0xf]
    %v67 = vld [vmem:[#allocation5 + $0x8] sm:$0xf]
    %v68 = vld [vmem:[#allocation5 + $0xc] sm:$0xf]
    %v69 = vld [vmem:[#allocation5 + $0x10] sm:$0xf]
    %v70 = vld [vmem:[#allocation5 + $0x14] sm:$0xf]
    %v71 = vld [vmem:[#allocation5 + $0x18] sm:$0xf]
    %v72 = vld [vmem:[#allocation5 + $0x1c] sm:$0xf]
    %v73 = vld [vmem:[#allocation5 + $0x20] sm:$0xf]
    %v74 = vld [vmem:[#allocation5 + $0x24] sm:$0xf]
    %v75 = vld [vmem:[#allocation5 + $0x28] sm:$0xf]
    %v76 = vld [vmem:[#allocation5 + $0x2c] sm:$0xf]
    %v77 = vld [vmem:[#allocation5 + $0x30] sm:$0xf]
    %v78 = vld [vmem:[#allocation5 + $0x34] sm:$0xf]
    %v79 = vld [vmem:[#allocation5 + $0x38] sm:$0xf]
    %v80 = vld [vmem:[#allocation5 + $0x3c] sm:$0xf]
    %v81 = vld [vmem:[#allocation5 + $0x40] sm:$0xf]
    %v82 = vld [vmem:[#allocation5 + $0x44] sm:$0xf]
    %v101 = vunpack.c.l.b16 %v65
    %v102 = vunpack.c.l.b16 %v66
    %v103 = vunpack.c.l.b16 %v67
    %v104 = vunpack.c.l.b16 %v68
    %v105 = vunpack.c.l.b16 %v69
    %v106 = vunpack.c.l.b16 %v70
    %v107 = vunpack.c.l.b16 %v71
    %v108 = vunpack.c.l.b16 %v72
    %v109 = vunpack.c.l.b16 %v73
    %v110 = vunpack.c.l.b16 %v74
    %v111 = vunpack.c.l.b16 %v75
    %v112 = vunpack.c.l.b16 %v76
    %v113 = vunpack.c.l.b16 %v77
    %v114 = vunpack.c.l.b16 %v78
    %v115 = vunpack.c.l.b16 %v79
    %v116 = vunpack.c.l.b16 %v80
    %v117 = vunpack.c.l.b16 %v81
    %v118 = vunpack.c.l.b16 %v82
    %v119 = vpack.c.b16 %v102, %v101
    %v120 = vpack.c.b16 %v104, %v103
    %v121 = vpack.c.b16 %v106, %v105
    %v122 = vpack.c.b16 %v108, %v107
    %v123 = vpack.c.b16 %v110, %v109
    %v124 = vpack.c.b16 %v112, %v111
    %v125 = vpack.c.b16 %v114, %v113
    %v126 = vpack.c.b16 %v116, %v115
    %v127 = vpack.c.b16 %v118, %v117
    %vm137 = vcmask 130048
    %v139 = vsel %vm137, %v58, 0
    %v142 = vsel %vm137, %v60, 0
    %v145 = vsel %vm137, %v62, 0
    %v148 = vsel %vm137, %v64, 0
    %150 = vmatprep.subr.bf16.mxu0 0
    %151 = vmatpush1.bf16.msra.mxu0 %v119
    %152 = vmatprep.subr.bf16.mxu0 0
    %153 = vmatpush1.bf16.msra.mxu0 %v120
    %154 = vmatprep.subr.bf16.mxu0 0
    %155 = vmatpush1.bf16.msra.mxu0 %v121
    %156 = vmatprep.subr.bf16.mxu0 0
    %157 = vmatpush1.bf16.msra.mxu0 %v122
    %158 = vmatprep.subr.bf16.mxu0 0
    %159 = vmatpush1.bf16.msra.mxu0 %v123
    %160 = vmatprep.subr.bf16.mxu0 0
    %161 = vmatpush1.bf16.msra.mxu0 %v124
    %162 = vmatprep.subr.bf16.mxu0 0
    %163 = vmatpush1.bf16.msra.mxu0 %v125
    %164 = vmatprep.subr.bf16.mxu0 0
    %165 = vmatpush1.bf16.msra.mxu0 %v126
    %166 = vmatprep.subr.bf16.mxu0 0
    %167 = vmatpush1.bf16.msra.mxu0 %v127
    %168 = vmatprep.subr.bf16.mxu0 0
    %169 = vmatpush1.bf16.msra.mxu0 0
    %170 = vmatprep.subr.bf16.mxu0 0
    %171 = vmatpush1.bf16.msra.mxu0 0
    %172 = vmatprep.subr.bf16.mxu0 0
    %173 = vmatpush1.bf16.msra.mxu0 0
    %174 = vmatprep.subr.bf16.mxu0 0
    %175 = vmatpush1.bf16.msra.mxu0 0
    %176 = vmatprep.subr.bf16.mxu0 0
    %177 = vmatpush1.bf16.msra.mxu0 0
    %178 = vmatprep.subr.bf16.mxu0 0
    %179 = vmatpush1.bf16.msra.mxu0 0
    %180 = vmatprep.subr.bf16.mxu0 0
    %181 = vmatpush1.bf16.msra.mxu0 0
    %182 = vmatprep.mubr.bf16.mxu0 %v139
    %183 = vmatmul.mubr.bf16.gmra.mrb[0].mxu0 %v57
    %v184 = vpop.f32.mrb[0].mxu0
    %v185 = vadd.f32 0.0, %v184
    %v186 = vpop.f32.mrb[0].mxu0
    %v187 = vpop.f32.mrb[0].mxu0
    %v188 = vadd.f32 0.0, %v187
    %v189 = vpop.f32.mrb[0].mxu0
    %190 = vmatprep.mubr.bf16.mxu0 %v142
    %191 = vmatmul.mubr.bf16.gmra.mrb[0].mxu0 %v59
    %v192 = vpop.f32.mrb[0].mxu0
    %v193 = vadd.f32 0.0, %v192
    %v194 = vpop.f32.mrb[0].mxu0
    %v195 = vpop.f32.mrb[0].mxu0
    %v196 = vadd.f32 0.0, %v195
    %v197 = vpop.f32.mrb[0].mxu0
    %198 = vmatprep.mubr.bf16.mxu0 %v145
    %199 = vmatmul.mubr.bf16.gmra.mrb[0].mxu0 %v61
    %v200 = vpop.f32.mrb[0].mxu0
    %v201 = vadd.f32 0.0, %v200
    %v202 = vpop.f32.mrb[0].mxu0
    %v203 = vpop.f32.mrb[0].mxu0
    %v204 = vadd.f32 0.0, %v203
    %v205 = vpop.f32.mrb[0].mxu0
    %206 = vmatprep.mubr.bf16.mxu0 %v148
    %207 = vmatmul.mubr.bf16.gmra.mrb[0].mxu0 %v63
    %v208 = vpop.f32.mrb[0].mxu0
    %v209 = vadd.f32 0.0, %v208
    %v210 = vpop.f32.mrb[0].mxu0
    %v211 = vpop.f32.mrb[0].mxu0
    %v212 = vadd.f32 0.0, %v211
    %v213 = vpop.f32.mrb[0].mxu0
    %214 = vdwg.mxu0
    %215 = vst [vmem:[#allocation7] sm:$0xff] %v185
    %216 = vst [vmem:[#allocation7 + $0x8] sm:$0xff] %v188
    %217 = vst [vmem:[#allocation7 + $0x10] sm:$0xff] %v193
    %218 = vst [vmem:[#allocation7 + $0x18] sm:$0xff] %v196
    %219 = vst [vmem:[#allocation7 + $0x20] sm:$0xff] %v201
    %220 = vst [vmem:[#allocation7 + $0x28] sm:$0xff] %v204
    %221 = vst [vmem:[#allocation7 + $0x30] sm:$0xff] %v209
    %222 = vst [vmem:[#allocation7 + $0x38] sm:$0xff] %v212
    // Predicated region
    $region18: #{tpu_custom_call.1} parent=1 // pred_check
      _
    $region19: #{tpu_custom_call.1} parent=1 // pred_check_branch
      %224 = sbr.rel (0) target = $region21
    $region20: #{tpu_custom_call.1} parent=1 // pred_region
      %s226 = ssub.s32 1024, 1024
      %227 = vsyncadd [#allocation4], %s226
      %s228 = sshll.u32 [#allocation7], 4
      %s229 = int_to_ptr.vmem [resolvable:$true] %s228
      %234 = dma.vmem_to_hbm [thread:$0]  %s229, 1024, %s2, [#allocation4], 128, 128, 8
    $region21: #{tpu_custom_call.1} parent=1 // pred_fallthru
      _
    // Predicated region
    $region22: #{tpu_custom_call.1} parent=1 // pred_check
      _
    $region23: #{tpu_custom_call.1} parent=1 // pred_check_branch
      %236 = sbr.rel (0) target = $region25
    $region24: #{tpu_custom_call.1} parent=1 // pred_region
      %237 = dma.done [#allocation4], 1024
    $region25: #{tpu_custom_call.1} parent=1 // pred_fallthru
      _
    %238 = vsyncpa [#allocation3], 1
    %239 = vsyncpa [#allocation6], 1
    %240 = vsyncpa [#allocation4], 1

</llo_original>
